<compile_context>
chip_gen: v5e
topology: v5e:2x2
jax: 0.10.0
libtpu: 0.0.40
codegen_flags: <defaults>
</compile_context>

<pallas_src>
import functools

import jax
import jax.numpy as jnp
from jax.experimental import pallas as pl
from jax.experimental.pallas import tpu as pltpu

LN_EPS = 1e-5  # PyTorch nn.LayerNorm default


def ffn_kernel(x_ref, w1t_ref, b1_ref, w2t_ref, b2_ref, g_ref, beta_ref,
               o_ref, acc_ref):
    k = pl.program_id(1)
    nk = pl.num_programs(1)

    @pl.when(k == 0)
    def _():
        acc_ref[...] = jnp.zeros_like(acc_ref)

    # MXU consumes operands in their native dtype (bf16 stays bf16); f32 accum.
    x = x_ref[...]                                                  # [TM, H]
    # fc1 partial: x @ W1^T[:, k-block] -> [TM, TK], bias + ReLU (elementwise,
    # exact under K-tiling since ReLU acts per intermediate column).
    h = jnp.dot(x, w1t_ref[...], preferred_element_type=jnp.float32)
    h = jnp.maximum(h + b1_ref[...].astype(jnp.float32), 0.0)
    # fc2 partial contraction over this K block, accumulated in f32 scratch.
    acc_ref[...] += jnp.dot(h.astype(w2t_ref.dtype), w2t_ref[...],
                            preferred_element_type=jnp.float32)

    @pl.when(k == nk - 1)
    def _():
        # Residual + bias + LayerNorm epilogue, all in f32 (VPU/EUP).
        z = x.astype(jnp.float32) + acc_ref[...] + b2_ref[...].astype(jnp.float32)
        inv_h = 1.0 / z.shape[-1]
        s1 = jnp.sum(z, axis=-1, keepdims=True)          # one pass over z vregs
        s2 = jnp.sum(z * z, axis=-1, keepdims=True)
        mean = s1 * inv_h
        var = s2 * inv_h - mean * mean
        inv = jax.lax.rsqrt(var + LN_EPS)                # EUP
        out = (z - mean) * inv * g_ref[...].astype(jnp.float32) \
            + beta_ref[...].astype(jnp.float32)
        o_ref[...] = out.astype(o_ref.dtype)


def _round_up(a, b):
    return (a + b - 1) // b * b


def _vmem_bytes(tm, tk, H, itemsize, single_weight_buffer):
    """Rough VMEM budget for one grid step (with pipelining buffers)."""
    wb = 1 if single_weight_buffer else 2
    b = 2 * tm * H * itemsize            # x tile (double-buffered)
    b += 2 * tm * H * itemsize           # out tile (double-buffered)
    b += wb * H * tk * itemsize          # W1^T block
    b += wb * tk * H * itemsize          # W2^T block
    b += wb * tk * itemsize              # b1 block
    b += 3 * H * itemsize                # b2, gamma, beta
    b += tm * H * 4                      # f32 accumulator scratch
    b += tm * tk * 4                     # fc1 intermediate headroom
    return b


def _pick_tiles(M, H, itemsize, tm_req):
    # Minimum sublane tile for the dtype (f32: 8, bf16: 16, 8-bit: 32).
    sub = {4: 8, 2: 16, 1: 32}.get(itemsize, 8)
    tm0 = max(min(_round_up(tm_req, sub), _round_up(M, sub)), sub)
    tk_cands = [H] + [t for t in (2048, 1024, 512, 256) if t < H and H % t == 0]
    budget = 48 << 20                    # leaves headroom inside v7x's 64 MiB VMEM
    for tm in (tm0, min(tm0, 128), min(tm0, 64)):
        tm = max(_round_up(tm, sub), sub)
        for tk in tk_cands:
            if _vmem_bytes(tm, tk, H, itemsize, tk == H) <= budget:
                return tm, tk
    return max(min(tm0, 64), sub), tk_cands[-1]


def _spec(shape, index_map, mode):
    if mode is None:
        return pl.BlockSpec(shape, index_map)
    return pl.BlockSpec(shape, index_map, pipeline_mode=mode)


@functools.partial(jax.jit, static_argnames=("tm", "tk", "single_buffer"))
def _ffn_pallas_impl(x, w1, b1, w2, b2, gamma, beta, *, tm, tk, single_buffer):
    B, S, H = x.shape
    M = B * S
    M_pad = _round_up(M, tm)

    x2 = x.reshape(M, H)
    if M_pad != M:
        # Pad trailing tokens instead of silently dropping M % tm of them.
        x2 = jnp.pad(x2, ((0, M_pad - M), (0, 0)))

    # nn.Linear stores W as [out, in]; transpose ONCE in the wrapper so the MXU
    # consumes the RHS directly (no per-iteration XLU transpose in the kernel).
    w1t = w1.T                      # [in, out]
    w2t = w2.T                      # [in, out]
    b1r = b1.reshape(1, H)
    b2r = b2.reshape(1, H)
    gr = gamma.reshape(1, H)
    br = beta.reshape(1, H)

    nk = H // tk
    single_k = nk == 1
    itemsize = jnp.dtype(x.dtype).itemsize

    # Explicit VMEM budget (default scoped limit is far below physical).
    vmem_limit = int(min(
        max(_vmem_bytes(tm, tk, H, itemsize, single_k and single_buffer) * 5 // 4
            + (8 << 20), 32 << 20),
        64 << 20))

    # Grid-invariant operands only need one VMEM buffer.
    inv_mode = pl.Buffered(1) if single_buffer else None
    w_mode = inv_mode if single_k else None   # weights vary over k when tiled

    grid = (M_pad // tm, nk)
    out = pl.pallas_call(
        ffn_kernel,
        out_shape=jax.ShapeDtypeStruct((M_pad, H), x.dtype),
        grid_spec=pltpu.PrefetchScalarGridSpec(
            num_scalar_prefetch=0,
            grid=grid,
            in_specs=[
                _spec((tm, H), lambda i, k: (i, 0), None),      # x tile
                _spec((H, tk), lambda i, k: (0, k), w_mode),    # W1^T block
                _spec((1, tk), lambda i, k: (0, k), w_mode),    # b1 block
                _spec((tk, H), lambda i, k: (k, 0), w_mode),    # W2^T block
                _spec((1, H), lambda i, k: (0, 0), inv_mode),   # b2
                _spec((1, H), lambda i, k: (0, 0), inv_mode),   # ln gamma
                _spec((1, H), lambda i, k: (0, 0), inv_mode),   # ln beta
            ],
            out_specs=pl.BlockSpec((tm, H), lambda i, k: (i, 0)),
            scratch_shapes=[pltpu.VMEM((tm, H), jnp.float32)],
        ),
        compiler_params=pltpu.CompilerParams(
            dimension_semantics=("parallel", "arbitrary"),
            vmem_limit_bytes=vmem_limit,
        ),
    )(x2, w1t, b1r, w2t, b2r, gr, br)

    return out[:M].reshape(B, S, H)


def ffn_pallas(x, w1, b1, w2, b2, gamma, beta, *, tm=256):
    """fc2(relu(fc1(x))) residual + LayerNorm, fused. x: [B, S, H]."""
    B, S, H = x.shape
    itemsize = jnp.dtype(x.dtype).itemsize
    tm_eff, tk = _pick_tiles(B * S, H, itemsize, tm)
    try:
        return _ffn_pallas_impl(x, w1, b1, w2, b2, gamma, beta,
                                tm=tm_eff, tk=tk, single_buffer=True)
    except Exception:
        # Fallback for jax versions without BlockSpec pipeline_mode / Buffered(1).
        return _ffn_pallas_impl(x, w1, b1, w2, b2, gamma, beta,
                                tm=tm_eff, tk=tk, single_buffer=False)


def ffn_reference(x, w1, b1, w2, b2, gamma, beta):
    h = jnp.maximum(x @ w1.T + b1, 0.0)
    y = h @ w2.T + b2
    z = x + y
    mean = jnp.mean(z, axis=-1, keepdims=True)
    var = jnp.mean((z - mean) ** 2, axis=-1, keepdims=True)
    return (z - mean) / jnp.sqrt(var + LN_EPS) * gamma + beta


if __name__ == "__main__":
    B, S, H = 2, 8, 32
    key = jax.random.PRNGKey(0)
    kx, k1, k2, k3, k4 = jax.random.split(key, 5)

    x = jax.random.normal(kx, (B, S, H), dtype=jnp.float32)
    # nn.Linear weights: [out_features, in_features]; deterministic init.
    bound = 1.0 / (H ** 0.5)
    w1 = jax.random.uniform(k1, (H, H), jnp.float32, -bound, bound)
    b1 = jax.random.uniform(k2, (H,), jnp.float32, -bound, bound)
    w2 = jax.random.uniform(k3, (H, H), jnp.float32, -bound, bound)
    b2 = jax.random.uniform(k4, (H,), jnp.float32, -bound, bound)
    gamma = jnp.ones((H,), jnp.float32)   # nn.LayerNorm default weight
    beta = jnp.zeros((H,), jnp.float32)   # nn.LayerNorm default bias

    out = ffn_pallas(x, w1, b1, w2, b2, gamma, beta)
    jax.block_until_ready(out)

    ref = ffn_reference(x, w1, b1, w2, b2, gamma, beta)
    assert out.shape == (B, S, H)
    assert jnp.allclose(out, ref, atol=1e-4, rtol=1e-4), "mismatch vs reference"
    print("KERNEL_OK")
</pallas_src>

<mosaic_0001>
module attributes {stable_mosaic.version = 11 : i64} {
  func.func @ffn_kernel(%arg0: i32, %arg1: i32, %arg2: memref<16x32xf32, #tpu.memory_space<vmem>>, %arg3: memref<32x32xf32, #tpu.memory_space<vmem>>, %arg4: memref<1x32xf32, #tpu.memory_space<vmem>>, %arg5: memref<32x32xf32, #tpu.memory_space<vmem>>, %arg6: memref<1x32xf32, #tpu.memory_space<vmem>>, %arg7: memref<1x32xf32, #tpu.memory_space<vmem>>, %arg8: memref<1x32xf32, #tpu.memory_space<vmem>>, %arg9: memref<16x32xf32, #tpu.memory_space<vmem>>, %arg10: memref<16x32xf32, #tpu.memory_space<vmem>>) attributes {dimension_semantics = [#tpu.dimension_semantics<parallel>, #tpu.dimension_semantics<arbitrary>], iteration_bounds = array<i64: 1, 1>, scalar_prefetch = 0 : i64, scratch_operands = 1 : i64, tpu.core_type = #tpu.core_type<tc>, window_params = [{transform_indices = @transform_0, window_bounds = array<i64: 16, 32>}, {pipeline_mode = #tpu.pipeline_mode<synchronous>, transform_indices = @transform_1, window_bounds = array<i64: 32, 32>}, {pipeline_mode = #tpu.pipeline_mode<synchronous>, transform_indices = @transform_2, window_bounds = array<i64: 1, 32>}, {pipeline_mode = #tpu.pipeline_mode<synchronous>, transform_indices = @transform_3, window_bounds = array<i64: 32, 32>}, {pipeline_mode = #tpu.pipeline_mode<synchronous>, transform_indices = @transform_4, window_bounds = array<i64: 1, 32>}, {pipeline_mode = #tpu.pipeline_mode<synchronous>, transform_indices = @transform_5, window_bounds = array<i64: 1, 32>}, {pipeline_mode = #tpu.pipeline_mode<synchronous>, transform_indices = @transform_6, window_bounds = array<i64: 1, 32>}, {transform_indices = @transform_7, window_bounds = array<i64: 16, 32>}]} {
    %c0_i32 = arith.constant 0 : i32
    %0 = arith.cmpi eq, %arg1, %c0_i32 : i32
    %1 = arith.extui %0 : i1 to i32
    %c0_i32_0 = arith.constant 0 : i32
    %2 = arith.cmpi ne, %1, %c0_i32_0 : i32
    scf.if %2 {
      %cst_16 = arith.constant 0.000000e+00 : f32
      %19 = vector.broadcast %cst_16 : f32 to vector<16x32xf32>
      %c0_17 = arith.constant 0 : index
      %c0_18 = arith.constant 0 : index
      %20 = vector.load %arg10[%c0_17, %c0_18] : memref<16x32xf32, #tpu.memory_space<vmem>>, vector<16x32xf32>
      tpu.vector_store %arg10[%c0_17, %c0_18], %19 {strides = array<i32>} : memref<16x32xf32, #tpu.memory_space<vmem>>, vector<16x32xf32>,
    } else {
    }
    %c0 = arith.constant 0 : index
    %c0_1 = arith.constant 0 : index
    %3 = vector.load %arg2[%c0, %c0_1] : memref<16x32xf32, #tpu.memory_space<vmem>>, vector<16x32xf32>
    %c0_2 = arith.constant 0 : index
    %c0_3 = arith.constant 0 : index
    %4 = vector.load %arg3[%c0_2, %c0_3] : memref<32x32xf32, #tpu.memory_space<vmem>>, vector<32x32xf32>
    %cst = arith.constant dense<0.000000e+00> : vector<16x32xf32>
    %5 = tpu.matmul %3, %4, %cst {dimension_numbers = #tpu.dot_dimension_numbers<[1], [0], [0], [1], [0, 0, 1, 1], [], []>} : vector<16x32xf32>, vector<32x32xf32>, vector<16x32xf32> -> vector<16x32xf32>
    %c0_4 = arith.constant 0 : index
    %c0_5 = arith.constant 0 : index
    %6 = vector.load %arg4[%c0_4, %c0_5] : memref<1x32xf32, #tpu.memory_space<vmem>>, vector<1x32xf32>
    %7 = vector.broadcast %6 : vector<1x32xf32> to vector<16x32xf32>
    %8 = arith.addf %5, %7 : vector<16x32xf32>
    %cst_6 = arith.constant 0.000000e+00 : f32
    %9 = vector.broadcast %cst_6 : f32 to vector<16x32xf32>
    %10 = arith.maximumf %8, %9 : vector<16x32xf32>
    %c0_7 = arith.constant 0 : index
    %c0_8 = arith.constant 0 : index
    %11 = vector.load %arg10[%c0_7, %c0_8] : memref<16x32xf32, #tpu.memory_space<vmem>>, vector<16x32xf32>
    %c0_9 = arith.constant 0 : index
    %c0_10 = arith.constant 0 : index
    %12 = vector.load %arg5[%c0_9, %c0_10] : memref<32x32xf32, #tpu.memory_space<vmem>>, vector<32x32xf32>
    %cst_11 = arith.constant dense<0.000000e+00> : vector<16x32xf32>
    %13 = tpu.matmul %10, %12, %cst_11 {dimension_numbers = #tpu.dot_dimension_numbers<[1], [0], [0], [1], [0, 0, 1, 1], [], []>} : vector<16x32xf32>, vector<32x32xf32>, vector<16x32xf32> -> vector<16x32xf32>
    %14 = arith.addf %11, %13 : vector<16x32xf32>
    %c0_12 = arith.constant 0 : index
    %c0_13 = arith.constant 0 : index
    %15 = vector.load %arg10[%c0_12, %c0_13] : memref<16x32xf32, #tpu.memory_space<vmem>>, vector<16x32xf32>
    tpu.vector_store %arg10[%c0_12, %c0_13], %14 {strides = array<i32>} : memref<16x32xf32, #tpu.memory_space<vmem>>, vector<16x32xf32>,
    %c0_i32_14 = arith.constant 0 : i32
    %16 = arith.cmpi eq, %arg1, %c0_i32_14 : i32
    %17 = arith.extui %16 : i1 to i32
    %c0_i32_15 = arith.constant 0 : i32
    %18 = arith.cmpi ne, %17, %c0_i32_15 : i32
    scf.if %18 {
      %c0_16 = arith.constant 0 : index
      %c0_17 = arith.constant 0 : index
      %19 = vector.load %arg10[%c0_16, %c0_17] : memref<16x32xf32, #tpu.memory_space<vmem>>, vector<16x32xf32>
      %20 = arith.addf %3, %19 : vector<16x32xf32>
      %c0_18 = arith.constant 0 : index
      %c0_19 = arith.constant 0 : index
      %21 = vector.load %arg6[%c0_18, %c0_19] : memref<1x32xf32, #tpu.memory_space<vmem>>, vector<1x32xf32>
      %22 = vector.broadcast %21 : vector<1x32xf32> to vector<16x32xf32>
      %23 = arith.addf %20, %22 : vector<16x32xf32>
      %cst_20 = arith.constant dense<0.000000e+00> : vector<16xf32>
      %24 = vector.multi_reduction <add>, %23, %cst_20 [1] : vector<16x32xf32> to vector<16xf32>
      %25 = vector.shape_cast %24 : vector<16xf32> to vector<16x1xf32>
      %26 = arith.mulf %23, %23 : vector<16x32xf32>
      %cst_21 = arith.constant dense<0.000000e+00> : vector<16xf32>
      %27 = vector.multi_reduction <add>, %26, %cst_21 [1] : vector<16x32xf32> to vector<16xf32>
      %28 = vector.shape_cast %27 : vector<16xf32> to vector<16x1xf32>
      %cst_22 = arith.constant 3.125000e-02 : f32
      %29 = vector.broadcast %cst_22 : f32 to vector<16x1xf32>
      %30 = arith.mulf %25, %29 : vector<16x1xf32>
      %cst_23 = arith.constant 3.125000e-02 : f32
      %31 = vector.broadcast %cst_23 : f32 to vector<16x1xf32>
      %32 = arith.mulf %28, %31 : vector<16x1xf32>
      %33 = arith.mulf %30, %30 : vector<16x1xf32>
      %34 = arith.subf %32, %33 : vector<16x1xf32>
      %cst_24 = arith.constant 9.99999974E-6 : f32
      %35 = vector.broadcast %cst_24 : f32 to vector<16x1xf32>
      %36 = arith.addf %34, %35 : vector<16x1xf32>
      %37 = math.rsqrt %36 : vector<16x1xf32>
      %38 = vector.broadcast %30 : vector<16x1xf32> to vector<16x32xf32>
      %39 = arith.subf %23, %38 : vector<16x32xf32>
      %40 = vector.broadcast %37 : vector<16x1xf32> to vector<16x32xf32>
      %41 = arith.mulf %39, %40 : vector<16x32xf32>
      %c0_25 = arith.constant 0 : index
      %c0_26 = arith.constant 0 : index
      %42 = vector.load %arg7[%c0_25, %c0_26] : memref<1x32xf32, #tpu.memory_space<vmem>>, vector<1x32xf32>
      %43 = vector.broadcast %42 : vector<1x32xf32> to vector<16x32xf32>
      %44 = arith.mulf %41, %43 : vector<16x32xf32>
      %c0_27 = arith.constant 0 : index
      %c0_28 = arith.constant 0 : index
      %45 = vector.load %arg8[%c0_27, %c0_28] : memref<1x32xf32, #tpu.memory_space<vmem>>, vector<1x32xf32>
      %46 = vector.broadcast %45 : vector<1x32xf32> to vector<16x32xf32>
      %47 = arith.addf %44, %46 : vector<16x32xf32>
      %c0_29 = arith.constant 0 : index
      %c0_30 = arith.constant 0 : index
      %48 = vector.load %arg9[%c0_29, %c0_30] : memref<16x32xf32, #tpu.memory_space<vmem>>, vector<16x32xf32>
      tpu.vector_store %arg9[%c0_29, %c0_30], %47 {strides = array<i32>} : memref<16x32xf32, #tpu.memory_space<vmem>>, vector<16x32xf32>,
    } else {
    }
    return
  }
  func.func @transform_0(%arg0: i32, %arg1: i32) -> (i32, i32) {
    %c0_i32 = arith.constant 0 : i32
    %c0_i32_0 = arith.constant 0 : i32
    return %arg0, %c0_i32 : i32, i32
  }
  func.func @transform_1(%arg0: i32, %arg1: i32) -> (i32, i32) {
    %c0_i32 = arith.constant 0 : i32
    %c0_i32_0 = arith.constant 0 : i32
    return %c0_i32, %arg1 : i32, i32
  }
  func.func @transform_2(%arg0: i32, %arg1: i32) -> (i32, i32) {
    %c0_i32 = arith.constant 0 : i32
    %c0_i32_0 = arith.constant 0 : i32
    return %c0_i32, %arg1 : i32, i32
  }
  func.func @transform_3(%arg0: i32, %arg1: i32) -> (i32, i32) {
    %c0_i32 = arith.constant 0 : i32
    %c0_i32_0 = arith.constant 0 : i32
    return %arg1, %c0_i32 : i32, i32
  }
  func.func @transform_4(%arg0: i32, %arg1: i32) -> (i32, i32) {
    %c0_i32 = arith.constant 0 : i32
    %c0_i32_0 = arith.constant 0 : i32
    %c0_i32_1 = arith.constant 0 : i32
    return %c0_i32, %c0_i32_0 : i32, i32
  }
  func.func @transform_5(%arg0: i32, %arg1: i32) -> (i32, i32) {
    %c0_i32 = arith.constant 0 : i32
    %c0_i32_0 = arith.constant 0 : i32
    %c0_i32_1 = arith.constant 0 : i32
    return %c0_i32, %c0_i32_0 : i32, i32
  }
  func.func @transform_6(%arg0: i32, %arg1: i32) -> (i32, i32) {
    %c0_i32 = arith.constant 0 : i32
    %c0_i32_0 = arith.constant 0 : i32
    %c0_i32_1 = arith.constant 0 : i32
    return %c0_i32, %c0_i32_0 : i32, i32
  }
  func.func @transform_7(%arg0: i32, %arg1: i32) -> (i32, i32) {
    %c0_i32 = arith.constant 0 : i32
    %c0_i32_0 = arith.constant 0 : i32
    return %arg0, %c0_i32 : i32, i32
  }
}

module attributes {stable_mosaic.version = 11 : i64} {
  func.func @ffn_kernel(%arg0: i32, %arg1: i32, %arg2: memref<16x32xf32, #tpu.memory_space<vmem>>, %arg3: memref<32x32xf32, #tpu.memory_space<vmem>>, %arg4: memref<1x32xf32, #tpu.memory_space<vmem>>, %arg5: memref<32x32xf32, #tpu.memory_space<vmem>>, %arg6: memref<1x32xf32, #tpu.memory_space<vmem>>, %arg7: memref<1x32xf32, #tpu.memory_space<vmem>>, %arg8: memref<1x32xf32, #tpu.memory_space<vmem>>, %arg9: memref<16x32xf32, #tpu.memory_space<vmem>>, %arg10: memref<16x32xf32, #tpu.memory_space<vmem>>) attributes {dimension_semantics = [#tpu.dimension_semantics<parallel>, #tpu.dimension_semantics<arbitrary>], iteration_bounds = array<i64: 1, 1>, scalar_prefetch = 0 : i64, scratch_operands = 1 : i64, tpu.core_type = #tpu.core_type<tc>, window_params = [{transform_indices = @transform_0, window_bounds = array<i64: 16, 32>}, {transform_indices = @transform_1, window_bounds = array<i64: 32, 32>}, {transform_indices = @transform_2, window_bounds = array<i64: 1, 32>}, {transform_indices = @transform_3, window_bounds = array<i64: 32, 32>}, {pipeline_mode = #tpu.pipeline_mode<synchronous>, transform_indices = @transform_4, window_bounds = array<i64: 1, 32>}, {pipeline_mode = #tpu.pipeline_mode<synchronous>, transform_indices = @transform_5, window_bounds = array<i64: 1, 32>}, {pipeline_mode = #tpu.pipeline_mode<synchronous>, transform_indices = @transform_6, window_bounds = array<i64: 1, 32>}, {transform_indices = @transform_7, window_bounds = array<i64: 16, 32>}]} {
    %c0_i32 = arith.constant 0 : i32
    %0 = arith.cmpi eq, %arg1, %c0_i32 : i32
    %1 = arith.extui %0 : i1 to i32
    %c0_i32_0 = arith.constant 0 : i32
    %2 = arith.cmpi ne, %1, %c0_i32_0 : i32
    scf.if %2 {
      %cst_16 = arith.constant 0.000000e+00 : f32
      %19 = vector.broadcast %cst_16 : f32 to vector<16x32xf32>
      %c0_17 = arith.constant 0 : index
      %c0_18 = arith.constant 0 : index
      %20 = vector.load %arg10[%c0_17, %c0_18] : memref<16x32xf32, #tpu.memory_space<vmem>>, vector<16x32xf32>
      tpu.vector_store %arg10[%c0_17, %c0_18], %19 {strides = array<i32>} : memref<16x32xf32, #tpu.memory_space<vmem>>, vector<16x32xf32>,
    } else {
    }
    %c0 = arith.constant 0 : index
    %c0_1 = arith.constant 0 : index
    %3 = vector.load %arg2[%c0, %c0_1] : memref<16x32xf32, #tpu.memory_space<vmem>>, vector<16x32xf32>
    %c0_2 = arith.constant 0 : index
    %c0_3 = arith.constant 0 : index
    %4 = vector.load %arg3[%c0_2, %c0_3] : memref<32x32xf32, #tpu.memory_space<vmem>>, vector<32x32xf32>
    %cst = arith.constant dense<0.000000e+00> : vector<16x32xf32>
    %5 = tpu.matmul %3, %4, %cst {dimension_numbers = #tpu.dot_dimension_numbers<[1], [0], [0], [1], [0, 0, 1, 1], [], []>} : vector<16x32xf32>, vector<32x32xf32>, vector<16x32xf32> -> vector<16x32xf32>
    %c0_4 = arith.constant 0 : index
    %c0_5 = arith.constant 0 : index
    %6 = vector.load %arg4[%c0_4, %c0_5] : memref<1x32xf32, #tpu.memory_space<vmem>>, vector<1x32xf32>
    %7 = vector.broadcast %6 : vector<1x32xf32> to vector<16x32xf32>
    %8 = arith.addf %5, %7 : vector<16x32xf32>
    %cst_6 = arith.constant 0.000000e+00 : f32
    %9 = vector.broadcast %cst_6 : f32 to vector<16x32xf32>
    %10 = arith.maximumf %8, %9 : vector<16x32xf32>
    %c0_7 = arith.constant 0 : index
    %c0_8 = arith.constant 0 : index
    %11 = vector.load %arg10[%c0_7, %c0_8] : memref<16x32xf32, #tpu.memory_space<vmem>>, vector<16x32xf32>
    %c0_9 = arith.constant 0 : index
    %c0_10 = arith.constant 0 : index
    %12 = vector.load %arg5[%c0_9, %c0_10] : memref<32x32xf32, #tpu.memory_space<vmem>>, vector<32x32xf32>
    %cst_11 = arith.constant dense<0.000000e+00> : vector<16x32xf32>
    %13 = tpu.matmul %10, %12, %cst_11 {dimension_numbers = #tpu.dot_dimension_numbers<[1], [0], [0], [1], [0, 0, 1, 1], [], []>} : vector<16x32xf32>, vector<32x32xf32>, vector<16x32xf32> -> vector<16x32xf32>
    %14 = arith.addf %11, %13 : vector<16x32xf32>
    %c0_12 = arith.constant 0 : index
    %c0_13 = arith.constant 0 : index
    %15 = vector.load %arg10[%c0_12, %c0_13] : memref<16x32xf32, #tpu.memory_space<vmem>>, vector<16x32xf32>
    tpu.vector_store %arg10[%c0_12, %c0_13], %14 {strides = array<i32>} : memref<16x32xf32, #tpu.memory_space<vmem>>, vector<16x32xf32>,
    %c0_i32_14 = arith.constant 0 : i32
    %16 = arith.cmpi eq, %arg1, %c0_i32_14 : i32
    %17 = arith.extui %16 : i1 to i32
    %c0_i32_15 = arith.constant 0 : i32
    %18 = arith.cmpi ne, %17, %c0_i32_15 : i32
    scf.if %18 {
      %c0_16 = arith.constant 0 : index
      %c0_17 = arith.constant 0 : index
      %19 = vector.load %arg10[%c0_16, %c0_17] : memref<16x32xf32, #tpu.memory_space<vmem>>, vector<16x32xf32>
      %20 = arith.addf %3, %19 : vector<16x32xf32>
      %c0_18 = arith.constant 0 : index
      %c0_19 = arith.constant 0 : index
      %21 = vector.load %arg6[%c0_18, %c0_19] : memref<1x32xf32, #tpu.memory_space<vmem>>, vector<1x32xf32>
      %22 = vector.broadcast %21 : vector<1x32xf32> to vector<16x32xf32>
      %23 = arith.addf %20, %22 : vector<16x32xf32>
      %cst_20 = arith.constant dense<0.000000e+00> : vector<16xf32>
      %24 = vector.multi_reduction <add>, %23, %cst_20 [1] : vector<16x32xf32> to vector<16xf32>
      %25 = vector.shape_cast %24 : vector<16xf32> to vector<16x1xf32>
      %26 = arith.mulf %23, %23 : vector<16x32xf32>
      %cst_21 = arith.constant dense<0.000000e+00> : vector<16xf32>
      %27 = vector.multi_reduction <add>, %26, %cst_21 [1] : vector<16x32xf32> to vector<16xf32>
      %28 = vector.shape_cast %27 : vector<16xf32> to vector<16x1xf32>
      %cst_22 = arith.constant 3.125000e-02 : f32
      %29 = vector.broadcast %cst_22 : f32 to vector<16x1xf32>
      %30 = arith.mulf %25, %29 : vector<16x1xf32>
      %cst_23 = arith.constant 3.125000e-02 : f32
      %31 = vector.broadcast %cst_23 : f32 to vector<16x1xf32>
      %32 = arith.mulf %28, %31 : vector<16x1xf32>
      %33 = arith.mulf %30, %30 : vector<16x1xf32>
      %34 = arith.subf %32, %33 : vector<16x1xf32>
      %cst_24 = arith.constant 9.99999974E-6 : f32
      %35 = vector.broadcast %cst_24 : f32 to vector<16x1xf32>
      %36 = arith.addf %34, %35 : vector<16x1xf32>
      %37 = math.rsqrt %36 : vector<16x1xf32>
      %38 = vector.broadcast %30 : vector<16x1xf32> to vector<16x32xf32>
      %39 = arith.subf %23, %38 : vector<16x32xf32>
      %40 = vector.broadcast %37 : vector<16x1xf32> to vector<16x32xf32>
      %41 = arith.mulf %39, %40 : vector<16x32xf32>
      %c0_25 = arith.constant 0 : index
      %c0_26 = arith.constant 0 : index
      %42 = vector.load %arg7[%c0_25, %c0_26] : memref<1x32xf32, #tpu.memory_space<vmem>>, vector<1x32xf32>
      %43 = vector.broadcast %42 : vector<1x32xf32> to vector<16x32xf32>
      %44 = arith.mulf %41, %43 : vector<16x32xf32>
      %c0_27 = arith.constant 0 : index
      %c0_28 = arith.constant 0 : index
      %45 = vector.load %arg8[%c0_27, %c0_28] : memref<1x32xf32, #tpu.memory_space<vmem>>, vector<1x32xf32>
      %46 = vector.broadcast %45 : vector<1x32xf32> to vector<16x32xf32>
      %47 = arith.addf %44, %46 : vector<16x32xf32>
      %c0_29 = arith.constant 0 : index
      %c0_30 = arith.constant 0 : index
      %48 = vector.load %arg9[%c0_29, %c0_30] : memref<16x32xf32, #tpu.memory_space<vmem>>, vector<16x32xf32>
      tpu.vector_store %arg9[%c0_29, %c0_30], %47 {strides = array<i32>} : memref<16x32xf32, #tpu.memory_space<vmem>>, vector<16x32xf32>,
    } else {
    }
    return
  }
  func.func @transform_0(%arg0: i32, %arg1: i32) -> (i32, i32) {
    %c0_i32 = arith.constant 0 : i32
    %c0_i32_0 = arith.constant 0 : i32
    return %arg0, %c0_i32 : i32, i32
  }
  func.func @transform_1(%arg0: i32, %arg1: i32) -> (i32, i32) {
    %c0_i32 = arith.constant 0 : i32
    %c0_i32_0 = arith.constant 0 : i32
    return %c0_i32, %arg1 : i32, i32
  }
  func.func @transform_2(%arg0: i32, %arg1: i32) -> (i32, i32) {
    %c0_i32 = arith.constant 0 : i32
    %c0_i32_0 = arith.constant 0 : i32
    return %c0_i32, %arg1 : i32, i32
  }
  func.func @transform_3(%arg0: i32, %arg1: i32) -> (i32, i32) {
    %c0_i32 = arith.constant 0 : i32
    %c0_i32_0 = arith.constant 0 : i32
    return %arg1, %c0_i32 : i32, i32
  }
  func.func @transform_4(%arg0: i32, %arg1: i32) -> (i32, i32) {
    %c0_i32 = arith.constant 0 : i32
    %c0_i32_0 = arith.constant 0 : i32
    %c0_i32_1 = arith.constant 0 : i32
    return %c0_i32, %c0_i32_0 : i32, i32
  }
  func.func @transform_5(%arg0: i32, %arg1: i32) -> (i32, i32) {
    %c0_i32 = arith.constant 0 : i32
    %c0_i32_0 = arith.constant 0 : i32
    %c0_i32_1 = arith.constant 0 : i32
    return %c0_i32, %c0_i32_0 : i32, i32
  }
  func.func @transform_6(%arg0: i32, %arg1: i32) -> (i32, i32) {
    %c0_i32 = arith.constant 0 : i32
    %c0_i32_0 = arith.constant 0 : i32
    %c0_i32_1 = arith.constant 0 : i32
    return %c0_i32, %c0_i32_0 : i32, i32
  }
  func.func @transform_7(%arg0: i32, %arg1: i32) -> (i32, i32) {
    %c0_i32 = arith.constant 0 : i32
    %c0_i32_0 = arith.constant 0 : i32
    return %arg0, %c0_i32 : i32, i32
  }
}

</mosaic_0001>

<llo_original>
// kernel: _ffn_pallas_impl.1
$region0: #{_ffn_pallas_impl.1}
  #allocation0 [shape = 'u32[]', space=smem, size = 0x4, offset = 0x4, fixed_abs, tag = 'smem constant byte address 0x4 - core index']
  #allocation1 [shape = 'u32[72,128]{1,0:T(1,128)}', space=vmem, size = 0x9000, scoped, tag = 'internal scratch']
  #allocation2 [shape = 'f32[16,32]{1,0:T(8,128)}', space=vmem, size = 0x2000, scoped, tag = 'scratch operand']
  %s0 = inlined_call_operand.vmem [shape: f32[16,32], index: 0, kind: input, shape index: {}]
  %s1 = inlined_call_operand.vmem [shape: f32[32,32], index: 1, kind: input, shape index: {}]
  %s2 = inlined_call_operand.vmem [shape: f32[1,32], index: 2, kind: input, shape index: {}]
  %s3 = inlined_call_operand.vmem [shape: f32[32,32], index: 3, kind: input, shape index: {}]
  %s4 = inlined_call_operand.vmem [shape: f32[1,32], index: 4, kind: input, shape index: {}]
  %s5 = inlined_call_operand.vmem [shape: f32[1,32], index: 5, kind: input, shape index: {}]
  %s6 = inlined_call_operand.vmem [shape: f32[1,32], index: 6, kind: input, shape index: {}]
  %s7 = inlined_call_operand.hbm [shape: f32[16,32], index: 7, kind: output, shape index: {}]
  %s8 = sld [smem:[#allocation0]]
  $region46: #{_ffn_pallas_impl.1} parent=0
    _
  %s10 = ssub.s32 1, %s8
  %s11 = scalar_select 0, %s10, %s8
  $region1: #{_ffn_pallas_impl.1} parent=0
    #allocation3 [shape = 'u8[8192]{0}', space=vmem, size = 0x2000, scoped, tag = 'output window, operand 0, single buffered']
    #allocation4 [shape = 's32[1]{0}', space=sflag, size = 0x4, scoped, tag = 'scoped memory for _ffn_pallas_impl.1']
    %12 = vsyncpa [#allocation4], 0
    // Predicated region
    $region2: #{_ffn_pallas_impl.1} parent=1 // pred_check
      _
    $region3: #{_ffn_pallas_impl.1} parent=1 // pred_check_branch
      %14 = sbr.rel (0) target = $region5
    $region4: #{_ffn_pallas_impl.1} parent=1 // pred_region
      _
    $region5: #{_ffn_pallas_impl.1} parent=1 // pred_fallthru
      _
    // Predicated region
    $region6: #{_ffn_pallas_impl.1} parent=1 // pred_check
      _
    $region7: #{_ffn_pallas_impl.1} parent=1 // pred_check_branch
      %16 = sbr.rel (0) target = $region9
    $region8: #{_ffn_pallas_impl.1} parent=1 // pred_region
      _
    $region9: #{_ffn_pallas_impl.1} parent=1 // pred_fallthru
      _
    // Predicated region
    $region10: #{_ffn_pallas_impl.1} parent=1 // pred_check
      _
    $region11: #{_ffn_pallas_impl.1} parent=1 // pred_check_branch
      %18 = sbr.rel (0) target = $region13
    $region12: #{_ffn_pallas_impl.1} parent=1 // pred_region
      _
    $region13: #{_ffn_pallas_impl.1} parent=1 // pred_fallthru
      _
    // Predicated region
    $region14: #{_ffn_pallas_impl.1} parent=1 // pred_check
      _
    $region15: #{_ffn_pallas_impl.1} parent=1 // pred_check_branch
      %20 = sbr.rel (0) target = $region17
    $region16: #{_ffn_pallas_impl.1} parent=1 // pred_region
      _
    $region17: #{_ffn_pallas_impl.1} parent=1 // pred_fallthru
      _
    // Predicated region
    $region18: #{_ffn_pallas_impl.1} parent=1 // pred_check
      _
    $region19: #{_ffn_pallas_impl.1} parent=1 // pred_check_branch
      %22 = sbr.rel (0) target = $region21
    $region20: #{_ffn_pallas_impl.1} parent=1 // pred_region
      _
    $region21: #{_ffn_pallas_impl.1} parent=1 // pred_fallthru
      _
    // Predicated region
    $region22: #{_ffn_pallas_impl.1} parent=1 // pred_check
      _
    $region23: #{_ffn_pallas_impl.1} parent=1 // pred_check_branch
      %24 = sbr.rel (0) target = $region25
    $region24: #{_ffn_pallas_impl.1} parent=1 // pred_region
      _
    $region25: #{_ffn_pallas_impl.1} parent=1 // pred_fallthru
      _
    // Predicated region
    $region26: #{_ffn_pallas_impl.1} parent=1 // pred_check
      _
    $region27: #{_ffn_pallas_impl.1} parent=1 // pred_check_branch
      %26 = sbr.rel (0) target = $region29
    $region28: #{_ffn_pallas_impl.1} parent=1 // pred_region
      _
    $region29: #{_ffn_pallas_impl.1} parent=1 // pred_fallthru
      _
    %p27 = scmp.eq.s32.totalorder 0, 0
    // Predicated region
    $region30: #{_ffn_pallas_impl.1} parent=1 // pred_check
      %p28 = pneg %p27
    $region31: #{_ffn_pallas_impl.1} parent=1 // pred_check_branch
      %30 = sbr.rel (%p28) target = $region33
    $region32: #{_ffn_pallas_impl.1} parent=1 // pred_region
      %vm31 = vcmask 261120
      %32 = vst.msk [vmem:[#allocation2] sm:$0xff] %vm31, 0.0
      %33 = vst.msk [vmem:[#allocation2 + $0x8] sm:$0xff] %vm31, 0.0
    $region33: #{_ffn_pallas_impl.1} parent=1 // pred_fallthru
      _
    %v34 = vld [vmem:[%s0] sm:$0xff]
    %v35 = vld [vmem:[%s0 + $0x8] sm:$0xff]
    %v36 = vld [vmem:[%s1] sm:$0xff]
    %v37 = vld [vmem:[%s1 + $0x8] sm:$0xff]
    %v38 = vld [vmem:[%s1 + $0x10] sm:$0xff]
    %v39 = vld [vmem:[%s1 + $0x18] sm:$0xff]
    %v40 = vld [vmem:[%s2] sm:$0x1]
    %v42 = vperm.slane %v40, 0
    %vm44 = vcmask 261120
    %v46 = vsel %vm44, %v34, 0
    %v49 = vsel %vm44, %v35, 0
    %51 = vmatpush.msra.mxu0 0.0
    %52 = vmatpush.msra.mxu0 0.0
    %53 = vmatpush.msra.mxu0 0.0
    %54 = vmatpush.msra.mxu0 0.0
    %55 = vmatpush.msra.mxu0 0.0
    %56 = vmatpush.msra.mxu0 0.0
    %57 = vmatpush.msra.mxu0 0.0
    %58 = vmatpush.msra.mxu0 0.0
    %59 = vmatpush.msra.mxu0 0.0
    %60 = vmatpush.msra.mxu0 0.0
    %61 = vmatpush.msra.mxu0 0.0
    %62 = vmatpush.msra.mxu0 0.0
    %63 = vmatpush.msra.mxu0 %v39
    %64 = vmatpush.msra.mxu0 %v38
    %65 = vmatpush.msra.mxu0 %v37
    %66 = vmatpush.msra.mxu0 %v36
    %67 = vmatmul.f32.gmra.mxu0 %v46
    %v68 = vpop.f32.mrf.mxu0
    %v69 = vadd.f32 %v42, %v68
    %70 = vmatmul.f32.gmra.mxu0 %v49
    %v71 = vpop.f32.mrf.mxu0
    %v72 = vadd.f32 %v42, %v71
    %73 = vdwg.mxu0
    %v74 = vmax.f32 %v69, 0.0
    %v75 = vmax.f32 %v72, 0.0
    %v76 = vld [vmem:[#allocation2] sm:$0xff]
    %v77 = vld [vmem:[#allocation2 + $0x8] sm:$0xff]
    %v78 = vld [vmem:[%s3] sm:$0xff]
    %v79 = vld [vmem:[%s3 + $0x8] sm:$0xff]
    %v80 = vld [vmem:[%s3 + $0x10] sm:$0xff]
    %v81 = vld [vmem:[%s3 + $0x18] sm:$0xff]
    %v83 = vsel %vm44, %v74, 0
    %v86 = vsel %vm44, %v75, 0
    %88 = vmatpush.msra.mxu0 0.0
    %89 = vmatpush.msra.mxu0 0.0
    %90 = vmatpush.msra.mxu0 0.0
    %91 = vmatpush.msra.mxu0 0.0
    %92 = vmatpush.msra.mxu0 0.0
    %93 = vmatpush.msra.mxu0 0.0
    %94 = vmatpush.msra.mxu0 0.0
    %95 = vmatpush.msra.mxu0 0.0
    %96 = vmatpush.msra.mxu0 0.0
    %97 = vmatpush.msra.mxu0 0.0
    %98 = vmatpush.msra.mxu0 0.0
    %99 = vmatpush.msra.mxu0 0.0
    %100 = vmatpush.msra.mxu0 %v81
    %101 = vmatpush.msra.mxu0 %v80
    %102 = vmatpush.msra.mxu0 %v79
    %103 = vmatpush.msra.mxu0 %v78
    %104 = vmatmul.f32.gmra.mxu0 %v83
    %v105 = vpop.f32.mrf.mxu0
    %v106 = vadd.f32 0.0, %v105
    %107 = vmatmul.f32.gmra.mxu0 %v86
    %v108 = vpop.f32.mrf.mxu0
    %v109 = vadd.f32 0.0, %v108
    %110 = vdwg.mxu0
    %v111 = vadd.f32 %v76, %v106
    %v112 = vadd.f32 %v77, %v109
    %113 = vst.msk [vmem:[#allocation2] sm:$0xff] %vm44, %v111
    %114 = vst.msk [vmem:[#allocation2 + $0x8] sm:$0xff] %vm44, %v112
    // Predicated region
    $region34: #{_ffn_pallas_impl.1} parent=1 // pred_check
      %p115 = pneg %p27
    $region35: #{_ffn_pallas_impl.1} parent=1 // pred_check_branch
      %117 = sbr.rel (%p115) target = $region37
    $region36: #{_ffn_pallas_impl.1} parent=1 // pred_region
      %v118 = vld [vmem:[#allocation2] sm:$0xff]
      %v119 = vld [vmem:[#allocation2 + $0x8] sm:$0xff]
      %v120 = vadd.f32 %v34, %v118
      %v121 = vadd.f32 %v35, %v119
      %v122 = vld [vmem:[%s4] sm:$0x1]
      %v124 = vperm.slane %v122, 0
      %v126 = vadd.f32 %v120, %v124
      %v127 = vadd.f32 %v121, %v124
      %v128 = vsel %vm44, %v126, 0.0
      %129 = vadd.xlane.f32.xlu0 %v128
      %v130 = vpop.xlane.xlu0 %129
      %v131 = vsel %vm44, %v127, 0.0
      %132 = vadd.xlane.f32.xlu0 %v131
      %v133 = vpop.xlane.xlu0 %132
      %v134 = vmul.f32 %v126, %v126
      %v135 = vmul.f32 %v127, %v127
      %v136 = vsel %vm44, %v134, 0.0
      %137 = vadd.xlane.f32.xlu0 %v136
      %v138 = vpop.xlane.xlu0 %137
      %v139 = vsel %vm44, %v135, 0.0
      %140 = vadd.xlane.f32.xlu0 %v139
      %v141 = vpop.xlane.xlu0 %140
      %v142 = vmul.f32 %v130, 0.03125
      %v143 = vmul.f32 %v133, 0.03125
      %v144 = vmul.f32 %v138, 0.03125
      %v145 = vmul.f32 %v141, 0.03125
      %v146 = vmul.f32 %v142, %v142
      %v147 = vmul.f32 %v143, %v143
      %v148 = vsub.f32 %v144, %v146
      %v149 = vsub.f32 %v145, %v147
      %v150 = vadd.f32 %v148, 1e-05
      %v151 = vadd.f32 %v149, 1e-05
      %v152 = vrsqrt.pop %v150
      %v153 = vmul.f32 %v152, %v150
      %v154 = vmul.f32 %v153, %v152
      %v155 = vmul.f32 0.5, %v154
      %v156 = vsub.f32 1.5, %v155
      %v157 = vmul.f32 %v152, %v156
      %vm158 = vweird.f32 %v150
      %vm159 = vweird.f32 %v152
      %vm160 = vmor %vm158, %vm159
      %v161 = vsel %vm160, %v152, %v157
      %v162 = vrsqrt.pop %v151
      %v163 = vmul.f32 %v162, %v151
      %v164 = vmul.f32 %v163, %v162
      %v165 = vmul.f32 0.5, %v164
      %v166 = vsub.f32 1.5, %v165
      %v167 = vmul.f32 %v162, %v166
      %vm168 = vweird.f32 %v151
      %vm169 = vweird.f32 %v162
      %vm170 = vmor %vm168, %vm169
      %v171 = vsel %vm170, %v162, %v167
      %v172 = vsub.f32 %v126, %v142
      %v173 = vsub.f32 %v127, %v143
      %v174 = vmul.f32 %v172, %v161
      %v175 = vmul.f32 %v173, %v171
      %v176 = vld [vmem:[%s5] sm:$0x1]
      %v178 = vperm.slane %v176, 0
      %v180 = vmul.f32 %v174, %v178
      %v181 = vmul.f32 %v175, %v178
      %v182 = vld [vmem:[%s6] sm:$0x1]
      %v184 = vperm.slane %v182, 0
      %v186 = vadd.f32 %v180, %v184
      %v187 = vadd.f32 %v181, %v184
      %188 = vst.msk [vmem:[#allocation3] sm:$0xff] %vm44, %v186
      %189 = vst.msk [vmem:[#allocation3 + $0x8] sm:$0xff] %vm44, %v187
    $region37: #{_ffn_pallas_impl.1} parent=1 // pred_fallthru
      _
    // Predicated region
    $region38: #{_ffn_pallas_impl.1} parent=1 // pred_check
      _
    $region39: #{_ffn_pallas_impl.1} parent=1 // pred_check_branch
      %191 = sbr.rel (0) target = $region41
    $region40: #{_ffn_pallas_impl.1} parent=1 // pred_region
      %193 = vsyncadd [#allocation4], 0
      %s194 = sshll.u32 [#allocation3], 4
      %s195 = int_to_ptr.vmem [resolvable:$true] %s194
      %s196 = sshll.u32 %s7, 4
      %s197 = int_to_ptr.hbm [resolvable:$true] %s196
      %202 = dma.vmem_to_hbm [thread:$0]  %s195, 256, %s197, [#allocation4], 128, 128, 8
    $region41: #{_ffn_pallas_impl.1} parent=1 // pred_fallthru
      _
    // Predicated region
    $region42: #{_ffn_pallas_impl.1} parent=1 // pred_check
      _
    $region43: #{_ffn_pallas_impl.1} parent=1 // pred_check_branch
      %204 = sbr.rel (0) target = $region45
    $region44: #{_ffn_pallas_impl.1} parent=1 // pred_region
      %206 = dma.done [#allocation4], 256
    $region45: #{_ffn_pallas_impl.1} parent=1 // pred_fallthru
      _
    %207 = vsyncpa [#allocation4], 1

// kernel: _ffn_pallas_impl.1
$region0: #{_ffn_pallas_impl.1}
  #allocation0 [shape = 'u32[]', space=smem, size = 0x4, offset = 0x4, fixed_abs, tag = 'smem constant byte address 0x4 - core index']
  #allocation1 [shape = 'u32[72,128]{1,0:T(1,128)}', space=vmem, size = 0x9000, scoped, tag = 'internal scratch']
  #allocation2 [shape = 'f32[16,32]{1,0:T(8,128)}', space=vmem, size = 0x2000, scoped, tag = 'scratch operand']
  %s0 = inlined_call_operand.vmem [shape: f32[16,32], index: 0, kind: input, shape index: {}]
  %s1 = inlined_call_operand.vmem [shape: f32[32,32], index: 1, kind: input, shape index: {}]
  %s2 = inlined_call_operand.vmem [shape: f32[1,32], index: 2, kind: input, shape index: {}]
  %s3 = inlined_call_operand.vmem [shape: f32[32,32], index: 3, kind: input, shape index: {}]
  %s4 = inlined_call_operand.vmem [shape: f32[1,32], index: 4, kind: input, shape index: {}]
  %s5 = inlined_call_operand.vmem [shape: f32[1,32], index: 5, kind: input, shape index: {}]
  %s6 = inlined_call_operand.vmem [shape: f32[1,32], index: 6, kind: input, shape index: {}]
  %s7 = inlined_call_operand.hbm [shape: f32[16,32], index: 7, kind: output, shape index: {}]
  %s8 = sld [smem:[#allocation0]]
  $region46: #{_ffn_pallas_impl.1} parent=0
    _
  %s10 = ssub.s32 1, %s8
  %s11 = scalar_select 0, %s10, %s8
  $region1: #{_ffn_pallas_impl.1} parent=0
    #allocation3 [shape = 'u8[8192]{0}', space=vmem, size = 0x2000, scoped, tag = 'output window, operand 0, single buffered']
    #allocation4 [shape = 's32[1]{0}', space=sflag, size = 0x4, scoped, tag = 'scoped memory for _ffn_pallas_impl.1']
    %12 = vsyncpa [#allocation4], 0
    // Predicated region
    $region2: #{_ffn_pallas_impl.1} parent=1 // pred_check
      _
    $region3: #{_ffn_pallas_impl.1} parent=1 // pred_check_branch
      %14 = sbr.rel (0) target = $region5
    $region4: #{_ffn_pallas_impl.1} parent=1 // pred_region
      _
    $region5: #{_ffn_pallas_impl.1} parent=1 // pred_fallthru
      _
    // Predicated region
    $region6: #{_ffn_pallas_impl.1} parent=1 // pred_check
      _
    $region7: #{_ffn_pallas_impl.1} parent=1 // pred_check_branch
      %16 = sbr.rel (0) target = $region9
    $region8: #{_ffn_pallas_impl.1} parent=1 // pred_region
      _
    $region9: #{_ffn_pallas_impl.1} parent=1 // pred_fallthru
      _
    // Predicated region
    $region10: #{_ffn_pallas_impl.1} parent=1 // pred_check
      _
    $region11: #{_ffn_pallas_impl.1} parent=1 // pred_check_branch
      %18 = sbr.rel (0) target = $region13
    $region12: #{_ffn_pallas_impl.1} parent=1 // pred_region
      _
    $region13: #{_ffn_pallas_impl.1} parent=1 // pred_fallthru
      _
    // Predicated region
    $region14: #{_ffn_pallas_impl.1} parent=1 // pred_check
      _
    $region15: #{_ffn_pallas_impl.1} parent=1 // pred_check_branch
      %20 = sbr.rel (0) target = $region17
    $region16: #{_ffn_pallas_impl.1} parent=1 // pred_region
      _
    $region17: #{_ffn_pallas_impl.1} parent=1 // pred_fallthru
      _
    // Predicated region
    $region18: #{_ffn_pallas_impl.1} parent=1 // pred_check
      _
    $region19: #{_ffn_pallas_impl.1} parent=1 // pred_check_branch
      %22 = sbr.rel (0) target = $region21
    $region20: #{_ffn_pallas_impl.1} parent=1 // pred_region
      _
    $region21: #{_ffn_pallas_impl.1} parent=1 // pred_fallthru
      _
    // Predicated region
    $region22: #{_ffn_pallas_impl.1} parent=1 // pred_check
      _
    $region23: #{_ffn_pallas_impl.1} parent=1 // pred_check_branch
      %24 = sbr.rel (0) target = $region25
    $region24: #{_ffn_pallas_impl.1} parent=1 // pred_region
      _
    $region25: #{_ffn_pallas_impl.1} parent=1 // pred_fallthru
      _
    // Predicated region
    $region26: #{_ffn_pallas_impl.1} parent=1 // pred_check
      _
    $region27: #{_ffn_pallas_impl.1} parent=1 // pred_check_branch
      %26 = sbr.rel (0) target = $region29
    $region28: #{_ffn_pallas_impl.1} parent=1 // pred_region
      _
    $region29: #{_ffn_pallas_impl.1} parent=1 // pred_fallthru
      _
    %p27 = scmp.eq.s32.totalorder 0, 0
    // Predicated region
    $region30: #{_ffn_pallas_impl.1} parent=1 // pred_check
      %p28 = pneg %p27
    $region31: #{_ffn_pallas_impl.1} parent=1 // pred_check_branch
      %30 = sbr.rel (%p28) target = $region33
    $region32: #{_ffn_pallas_impl.1} parent=1 // pred_region
      %vm31 = vcmask 261120
      %32 = vst.msk [vmem:[#allocation2] sm:$0xff] %vm31, 0.0
      %33 = vst.msk [vmem:[#allocation2 + $0x8] sm:$0xff] %vm31, 0.0
    $region33: #{_ffn_pallas_impl.1} parent=1 // pred_fallthru
      _
    %v34 = vld [vmem:[%s0] sm:$0xff]
    %v35 = vld [vmem:[%s0 + $0x8] sm:$0xff]
    %v36 = vld [vmem:[%s1] sm:$0xff]
    %v37 = vld [vmem:[%s1 + $0x8] sm:$0xff]
    %v38 = vld [vmem:[%s1 + $0x10] sm:$0xff]
    %v39 = vld [vmem:[%s1 + $0x18] sm:$0xff]
    %v40 = vld [vmem:[%s2] sm:$0x1]
    %v42 = vperm.slane %v40, 0
    %vm44 = vcmask 261120
    %v46 = vsel %vm44, %v34, 0
    %v49 = vsel %vm44, %v35, 0
    %51 = vmatpush.msra.mxu0 0.0
    %52 = vmatpush.msra.mxu0 0.0
    %53 = vmatpush.msra.mxu0 0.0
    %54 = vmatpush.msra.mxu0 0.0
    %55 = vmatpush.msra.mxu0 0.0
    %56 = vmatpush.msra.mxu0 0.0
    %57 = vmatpush.msra.mxu0 0.0
    %58 = vmatpush.msra.mxu0 0.0
    %59 = vmatpush.msra.mxu0 0.0
    %60 = vmatpush.msra.mxu0 0.0
    %61 = vmatpush.msra.mxu0 0.0
    %62 = vmatpush.msra.mxu0 0.0
    %63 = vmatpush.msra.mxu0 %v39
    %64 = vmatpush.msra.mxu0 %v38
    %65 = vmatpush.msra.mxu0 %v37
    %66 = vmatpush.msra.mxu0 %v36
    %67 = vmatmul.f32.gmra.mxu0 %v46
    %v68 = vpop.f32.mrf.mxu0
    %v69 = vadd.f32 %v42, %v68
    %70 = vmatmul.f32.gmra.mxu0 %v49
    %v71 = vpop.f32.mrf.mxu0
    %v72 = vadd.f32 %v42, %v71
    %73 = vdwg.mxu0
    %v74 = vmax.f32 %v69, 0.0
    %v75 = vmax.f32 %v72, 0.0
    %v76 = vld [vmem:[#allocation2] sm:$0xff]
    %v77 = vld [vmem:[#allocation2 + $0x8] sm:$0xff]
    %v78 = vld [vmem:[%s3] sm:$0xff]
    %v79 = vld [vmem:[%s3 + $0x8] sm:$0xff]
    %v80 = vld [vmem:[%s3 + $0x10] sm:$0xff]
    %v81 = vld [vmem:[%s3 + $0x18] sm:$0xff]
    %v83 = vsel %vm44, %v74, 0
    %v86 = vsel %vm44, %v75, 0
    %88 = vmatpush.msra.mxu0 0.0
    %89 = vmatpush.msra.mxu0 0.0
    %90 = vmatpush.msra.mxu0 0.0
    %91 = vmatpush.msra.mxu0 0.0
    %92 = vmatpush.msra.mxu0 0.0
    %93 = vmatpush.msra.mxu0 0.0
    %94 = vmatpush.msra.mxu0 0.0
    %95 = vmatpush.msra.mxu0 0.0
    %96 = vmatpush.msra.mxu0 0.0
    %97 = vmatpush.msra.mxu0 0.0
    %98 = vmatpush.msra.mxu0 0.0
    %99 = vmatpush.msra.mxu0 0.0
    %100 = vmatpush.msra.mxu0 %v81
    %101 = vmatpush.msra.mxu0 %v80
    %102 = vmatpush.msra.mxu0 %v79
    %103 = vmatpush.msra.mxu0 %v78
    %104 = vmatmul.f32.gmra.mxu0 %v83
    %v105 = vpop.f32.mrf.mxu0
    %v106 = vadd.f32 0.0, %v105
    %107 = vmatmul.f32.gmra.mxu0 %v86
    %v108 = vpop.f32.mrf.mxu0
    %v109 = vadd.f32 0.0, %v108
    %110 = vdwg.mxu0
    %v111 = vadd.f32 %v76, %v106
    %v112 = vadd.f32 %v77, %v109
    %113 = vst.msk [vmem:[#allocation2] sm:$0xff] %vm44, %v111
    %114 = vst.msk [vmem:[#allocation2 + $0x8] sm:$0xff] %vm44, %v112
    // Predicated region
    $region34: #{_ffn_pallas_impl.1} parent=1 // pred_check
      %p115 = pneg %p27
    $region35: #{_ffn_pallas_impl.1} parent=1 // pred_check_branch
      %117 = sbr.rel (%p115) target = $region37
    $region36: #{_ffn_pallas_impl.1} parent=1 // pred_region
      %v118 = vld [vmem:[#allocation2] sm:$0xff]
      %v119 = vld [vmem:[#allocation2 + $0x8] sm:$0xff]
      %v120 = vadd.f32 %v34, %v118
      %v121 = vadd.f32 %v35, %v119
      %v122 = vld [vmem:[%s4] sm:$0x1]
      %v124 = vperm.slane %v122, 0
      %v126 = vadd.f32 %v120, %v124
      %v127 = vadd.f32 %v121, %v124
      %v128 = vsel %vm44, %v126, 0.0
      %129 = vadd.xlane.f32.xlu0 %v128
      %v130 = vpop.xlane.xlu0 %129
      %v131 = vsel %vm44, %v127, 0.0
      %132 = vadd.xlane.f32.xlu0 %v131
      %v133 = vpop.xlane.xlu0 %132
      %v134 = vmul.f32 %v126, %v126
      %v135 = vmul.f32 %v127, %v127
      %v136 = vsel %vm44, %v134, 0.0
      %137 = vadd.xlane.f32.xlu0 %v136
      %v138 = vpop.xlane.xlu0 %137
      %v139 = vsel %vm44, %v135, 0.0
      %140 = vadd.xlane.f32.xlu0 %v139
      %v141 = vpop.xlane.xlu0 %140
      %v142 = vmul.f32 %v130, 0.03125
      %v143 = vmul.f32 %v133, 0.03125
      %v144 = vmul.f32 %v138, 0.03125
      %v145 = vmul.f32 %v141, 0.03125
      %v146 = vmul.f32 %v142, %v142
      %v147 = vmul.f32 %v143, %v143
      %v148 = vsub.f32 %v144, %v146
      %v149 = vsub.f32 %v145, %v147
      %v150 = vadd.f32 %v148, 1e-05
      %v151 = vadd.f32 %v149, 1e-05
      %v152 = vrsqrt.pop %v150
      %v153 = vmul.f32 %v152, %v150
      %v154 = vmul.f32 %v153, %v152
      %v155 = vmul.f32 0.5, %v154
      %v156 = vsub.f32 1.5, %v155
      %v157 = vmul.f32 %v152, %v156
      %vm158 = vweird.f32 %v150
      %vm159 = vweird.f32 %v152
      %vm160 = vmor %vm158, %vm159
      %v161 = vsel %vm160, %v152, %v157
      %v162 = vrsqrt.pop %v151
      %v163 = vmul.f32 %v162, %v151
      %v164 = vmul.f32 %v163, %v162
      %v165 = vmul.f32 0.5, %v164
      %v166 = vsub.f32 1.5, %v165
      %v167 = vmul.f32 %v162, %v166
      %vm168 = vweird.f32 %v151
      %vm169 = vweird.f32 %v162
      %vm170 = vmor %vm168, %vm169
      %v171 = vsel %vm170, %v162, %v167
      %v172 = vsub.f32 %v126, %v142
      %v173 = vsub.f32 %v127, %v143
      %v174 = vmul.f32 %v172, %v161
      %v175 = vmul.f32 %v173, %v171
      %v176 = vld [vmem:[%s5] sm:$0x1]
      %v178 = vperm.slane %v176, 0
      %v180 = vmul.f32 %v174, %v178
      %v181 = vmul.f32 %v175, %v178
      %v182 = vld [vmem:[%s6] sm:$0x1]
      %v184 = vperm.slane %v182, 0
      %v186 = vadd.f32 %v180, %v184
      %v187 = vadd.f32 %v181, %v184
      %188 = vst.msk [vmem:[#allocation3] sm:$0xff] %vm44, %v186
      %189 = vst.msk [vmem:[#allocation3 + $0x8] sm:$0xff] %vm44, %v187
    $region37: #{_ffn_pallas_impl.1} parent=1 // pred_fallthru
      _
    // Predicated region
    $region38: #{_ffn_pallas_impl.1} parent=1 // pred_check
      _
    $region39: #{_ffn_pallas_impl.1} parent=1 // pred_check_branch
      %191 = sbr.rel (0) target = $region41
    $region40: #{_ffn_pallas_impl.1} parent=1 // pred_region
      %193 = vsyncadd [#allocation4], 0
      %s194 = sshll.u32 [#allocation3], 4
      %s195 = int_to_ptr.vmem [resolvable:$true] %s194
      %s196 = sshll.u32 %s7, 4
      %s197 = int_to_ptr.hbm [resolvable:$true] %s196
      %202 = dma.vmem_to_hbm [thread:$0]  %s195, 256, %s197, [#allocation4], 128, 128, 8
    $region41: #{_ffn_pallas_impl.1} parent=1 // pred_fallthru
      _
    // Predicated region
    $region42: #{_ffn_pallas_impl.1} parent=1 // pred_check
      _
    $region43: #{_ffn_pallas_impl.1} parent=1 // pred_check_branch
      %204 = sbr.rel (0) target = $region45
    $region44: #{_ffn_pallas_impl.1} parent=1 // pred_region
      %206 = dma.done [#allocation4], 256
    $region45: #{_ffn_pallas_impl.1} parent=1 // pred_fallthru
      _
    %207 = vsyncpa [#allocation4], 1

</llo_original>
